<compile_context>
chip_gen: v7x
topology: tpu7x:2x2x1
jax: 0.10.0
libtpu: 0.0.40
codegen_flags: <defaults>
</compile_context>

<pallas_src>
import jax
import jax.numpy as jnp
from jax.experimental import pallas as pl
from jax.experimental.pallas import tpu as pltpu

_LN_EPS = 1e-5
_MiB = 1024 * 1024


# --------------------------------------------------------------------------
# Helpers
# --------------------------------------------------------------------------
def _round_up(v, m):
    return ((v + m - 1) // m) * m


def _vmem_capacity_bytes():
    try:
        info = pltpu.get_tpu_info()
        cap = getattr(info, "vmem_capacity_bytes", None)
        if cap:
            return int(cap)
    except Exception:
        pass
    return 128 * _MiB  # conservative default (v5e/v6e)


def _vmem_caps():
    """(physical capacity, safe scoped-limit cap) for this generation."""
    cap = _vmem_capacity_bytes()
    if cap <= 64 * _MiB:                      # v7x: 64 MiB physical per TC
        return cap, 52 * _MiB                 # leave room for pipeline + scratch
    return cap, min(cap - 20 * _MiB, 108 * _MiB)   # v5e/v6e: 128 MiB physical


# --------------------------------------------------------------------------
# Kernel bodies
# --------------------------------------------------------------------------
def _make_resident_kernel(d_real):
    """Weight-resident path: both weight matrices live in VMEM (Buffered(1))."""
    inv_d = 1.0 / float(d_real)

    def kernel(x_ref, lnw_ref, lnb_ref, w1_ref, b1_ref, w2_ref, b2_ref, o_ref):
        # ---- one-pass LayerNorm (f32 stats).  Padded lanes of x are zero so
        # they contribute 0 to both sums; inv_d uses the real D.
        x = x_ref[...].astype(jnp.float32)                    # (TM, Dp)
        s = jnp.sum(x, axis=-1, keepdims=True)
        sq = jnp.sum(x * x, axis=-1, keepdims=True)
        mean = s * inv_d
        var = jnp.maximum(sq * inv_d - mean * mean, 0.0)
        xn = (x - mean) * jax.lax.rsqrt(var + _LN_EPS)
        # gamma/beta are zero-padded, so padded lanes of xn become exactly 0.
        xn = xn * lnw_ref[...] + lnb_ref[...]

        # ---- Linear1 + ReLU: MXU in the weights' native dtype, f32 acc
        h = jnp.dot(xn.astype(w1_ref.dtype), w1_ref[...],
                    preferred_element_type=jnp.float32) + b1_ref[...]
        h = jnp.maximum(h, 0.0)

        # ---- Linear2
        y = jnp.dot(h.astype(w2_ref.dtype), w2_ref[...],
                    preferred_element_type=jnp.float32) + b2_ref[...]

        # ---- Residual: re-read x from VMEM (short f32 live range)
        o_ref[...] = (x_ref[...].astype(jnp.float32) + y).astype(o_ref.dtype)

    return kernel


def _make_htiled_kernel(d_real):
    """H-tiled path: second grid axis over hidden-dim chunks, accumulate in
    an f32 VMEM scratch, finalize residual + store on the last chunk."""
    inv_d = 1.0 / float(d_real)

    def kernel(x_ref, lnw_ref, lnb_ref, w1_ref, b1_ref, w2_ref, b2_ref, o_ref,
               xn_ref, acc_ref):
        hstep = pl.program_id(1)

        @pl.when(hstep == 0)
        def _():
            x = x_ref[...].astype(jnp.float32)
            s = jnp.sum(x, axis=-1, keepdims=True)
            sq = jnp.sum(x * x, axis=-1, keepdims=True)
            mean = s * inv_d
            var = jnp.maximum(sq * inv_d - mean * mean, 0.0)
            xn = (x - mean) * jax.lax.rsqrt(var + _LN_EPS)
            xn_ref[...] = xn * lnw_ref[...] + lnb_ref[...]
            acc_ref[...] = jnp.zeros_like(acc_ref)

        xn = xn_ref[...]
        hc = jnp.dot(xn.astype(w1_ref.dtype), w1_ref[...],
                     preferred_element_type=jnp.float32) + b1_ref[...]
        hc = jnp.maximum(hc, 0.0)
        acc_ref[...] += jnp.dot(hc.astype(w2_ref.dtype), w2_ref[...],
                                preferred_element_type=jnp.float32)

        @pl.when(hstep == pl.num_programs(1) - 1)
        def _():
            o_ref[...] = (x_ref[...].astype(jnp.float32) + acc_ref[...]
                          + b2_ref[...]).astype(o_ref.dtype)

    return kernel


# --------------------------------------------------------------------------
# Parameter preparation (do ONCE and cache — hoists padding/casts off the
# per-call hot path)
# --------------------------------------------------------------------------
def prepare_params(ln_w, ln_b, w1, b1, w2, b2, *, compute_dtype=None):
    """Pad feature dims to multiples of 128 (lane-dense) and pre-cast:
       - weights to `compute_dtype` (e.g. jnp.bfloat16 for MXU-native speed),
         or their own dtype when compute_dtype is None,
       - LN params / biases to f32 (tiny vectors, read once per grid step)."""
    D, H = w1.shape
    Dp, Hp = _round_up(D, 128), _round_up(H, 128)
    wdt = w1.dtype if compute_dtype is None else compute_dtype
    f32 = jnp.float32
    return dict(
        D=D, H=H, Dp=Dp, Hp=Hp,
        w1=jnp.pad(w1.astype(wdt), ((0, Dp - D), (0, Hp - H))),
        w2=jnp.pad(w2.astype(wdt), ((0, Hp - H), (0, Dp - D))),
        ln_w=jnp.pad(ln_w.astype(f32), (0, Dp - D)).reshape(1, Dp),
        ln_b=jnp.pad(ln_b.astype(f32), (0, Dp - D)).reshape(1, Dp),
        b1=jnp.pad(b1.astype(f32), (0, Hp - H)).reshape(1, Hp),
        b2=jnp.pad(b2.astype(f32), (0, Dp - D)).reshape(1, Dp),
    )


# --------------------------------------------------------------------------
# Wrapper
# --------------------------------------------------------------------------
def feature_mixer_layer(x, params, *, tile_rows=256, force_h_tiling=False):
    """x: (..., D).  params: dict from prepare_params (cache it between calls).
    Returns the same shape/dtype as x."""
    orig_shape = x.shape
    D, H = params["D"], params["H"]
    Dp, Hp = params["Dp"], params["Hp"]
    assert orig_shape[-1] == D

    x2d = x.reshape(-1, D)
    R = x2d.shape[0]

    # Row tile: multiple of 8 sublanes, default 256 for MXU M-dim utilization,
    # clamped to the row count; force >= 2 grid steps when possible so the
    # DMA pipeline (and v7x's 2nd TensorCore) is used on small batches.
    tm = min(max(tile_rows, 8), _round_up(R, 8))
    tm = _round_up(tm, 8)
    if _round_up(R, tm) // tm < 2 and R > 8:
        tm = max(8, _round_up((R + 1) // 2, 8))
    R_pad = _round_up(R, tm)

    # Pad rows / lanes only when needed.
    if R_pad != R or Dp != D:
        x2d = jnp.pad(x2d, ((0, R_pad - R), (0, Dp - D)))

    itm_x = jnp.dtype(x.dtype).itemsize
    itm_w = jnp.dtype(params["w1"].dtype).itemsize
    _, limit_cap = _vmem_caps()

    # VMEM estimate for the weight-resident plan (weights single-buffered).
    resident_est = (
        4 * tm * Dp * itm_x                # x + out tiles, double-buffered
        + 2 * Dp * Hp * itm_w              # W1 + W2, single-buffered
        + (3 * Dp + Hp) * 4                # small f32 vectors, single-buffered
        + tm * (2 * Dp + Hp) * 4           # in-body f32 temporaries margin
    )
    use_h_tiling = force_h_tiling or resident_est > limit_cap

    cost = pl.CostEstimate(
        flops=int(4 * R * D * H + 10 * R * D),
        transcendentals=int(R),
        bytes_accessed=int(2 * R * D * itm_x + 2 * D * H * itm_w
                           + 4 * (3 * D + H)),
    )

    x_spec = pl.BlockSpec((tm, Dp), lambda i, *_: (i, 0))
    out_spec = pl.BlockSpec((tm, Dp), lambda i, *_: (i, 0))
    once = pl.Buffered(1)   # constant-index blocks: no point double-buffering

    if not use_h_tiling:
        # ---- Path A: weight-resident, 1-D grid over row tiles --------------
        vmem_limit = int(min(max(resident_est * 1.25, 32 * _MiB), limit_cap))
        const = lambda i: (0, 0)
        out = pl.pallas_call(
            _make_resident_kernel(D),
            out_shape=jax.ShapeDtypeStruct((R_pad, Dp), x.dtype),
            grid_spec=pltpu.PrefetchScalarGridSpec(
                num_scalar_prefetch=0,
                grid=(R_pad // tm,),
                in_specs=[
                    x_spec,
                    pl.BlockSpec((1, Dp), const, pipeline_mode=once),   # gamma
                    pl.BlockSpec((1, Dp), const, pipeline_mode=once),   # beta
                    pl.BlockSpec((Dp, Hp), const, pipeline_mode=once),  # W1
                    pl.BlockSpec((1, Hp), const, pipeline_mode=once),   # b1
                    pl.BlockSpec((Hp, Dp), const, pipeline_mode=once),  # W2
                    pl.BlockSpec((1, Dp), const, pipeline_mode=once),   # b2
                ],
                out_specs=out_spec,
            ),
            compiler_params=pltpu.CompilerParams(
                dimension_semantics=("parallel",),
                vmem_limit_bytes=vmem_limit,
            ),
            cost_estimate=cost,
        )(x2d, params["ln_w"], params["ln_b"], params["w1"], params["b1"],
          params["w2"], params["b2"])
    else:
        # ---- Path B: H-tiled (for large D*H, esp. v7x's 64 MiB VMEM) -------
        L = Hp // 128  # number of 128-lane groups along H

        def htiled_est(th):
            return (4 * tm * Dp * itm_x
                    + 4 * Dp * th * itm_w + 2 * th * 4   # W1/W2/b1 chunks, 2-buf
                    + 3 * Dp * 4                         # gamma/beta/b2, 1-buf
                    + 2 * tm * Dp * 4                    # xn + acc scratch
                    + tm * (2 * Dp + th) * 4)            # temporaries margin

        if force_h_tiling and L >= 2:
            nh = L
        else:
            nh = L
            for cand in range(1, L + 1):
                if L % cand == 0 and htiled_est(Hp // cand) <= limit_cap:
                    nh = cand
                    break
        th = Hp // nh
        vmem_limit = int(min(max(htiled_est(th) * 1.25, 32 * _MiB), limit_cap))
        const2 = lambda i, h: (0, 0)

        out = pl.pallas_call(
            _make_htiled_kernel(D),
            out_shape=jax.ShapeDtypeStruct((R_pad, Dp), x.dtype),
            grid_spec=pltpu.PrefetchScalarGridSpec(
                num_scalar_prefetch=0,
                grid=(R_pad // tm, nh),
                in_specs=[
                    pl.BlockSpec((tm, Dp), lambda i, h: (i, 0)),           # x
                    pl.BlockSpec((1, Dp), const2, pipeline_mode=once),     # gamma
                    pl.BlockSpec((1, Dp), const2, pipeline_mode=once),     # beta
                    pl.BlockSpec((Dp, th), lambda i, h: (0, h)),           # W1 chunk
                    pl.BlockSpec((1, th), lambda i, h: (0, h)),            # b1 chunk
                    pl.BlockSpec((th, Dp), lambda i, h: (h, 0)),           # W2 chunk
                    pl.BlockSpec((1, Dp), const2, pipeline_mode=once),     # b2
                ],
                out_specs=pl.BlockSpec((tm, Dp), lambda i, h: (i, 0)),
                scratch_shapes=[pltpu.VMEM((tm, Dp), jnp.float32),   # xn
                                pltpu.VMEM((tm, Dp), jnp.float32)],  # acc
            ),
            compiler_params=pltpu.CompilerParams(
                dimension_semantics=("parallel", "arbitrary"),
                vmem_limit_bytes=vmem_limit,
            ),
            cost_estimate=cost,
        )(x2d, params["ln_w"], params["ln_b"], params["w1"], params["b1"],
          params["w2"], params["b2"])

    return out[:R, :D].reshape(orig_shape)


# --------------------------------------------------------------------------
# Params / reference
# --------------------------------------------------------------------------
def init_params(key, in_dim, mlp_ratio=1, dtype=jnp.float32):
    """Deterministic init mirroring the PyTorch module:
       LayerNorm: weight=1, bias=0
       Linear: trunc_normal(std=0.02) weights, zero biases."""
    hidden = int(in_dim * mlp_ratio)
    k1, k2 = jax.random.split(key, 2)

    def trunc(k, shape):
        return (0.02 * jax.random.truncated_normal(k, -2.0, 2.0, shape)).astype(dtype)

    ln_w = jnp.ones((in_dim,), dtype)
    ln_b = jnp.zeros((in_dim,), dtype)
    w1 = trunc(k1, (in_dim, hidden))   # stored as (in, out) = PyTorch W1.T
    b1 = jnp.zeros((hidden,), dtype)
    w2 = trunc(k2, (hidden, in_dim))   # stored as (in, out) = PyTorch W2.T
    b2 = jnp.zeros((in_dim,), dtype)
    return ln_w, ln_b, w1, b1, w2, b2


def _reference(x, ln_w, ln_b, w1, b1, w2, b2):
    # Pure-JAX reference of the PyTorch forward (f32 math, two-pass LN).
    xf = x.astype(jnp.float32)
    mean = jnp.mean(xf, axis=-1, keepdims=True)
    var = jnp.mean((xf - mean) ** 2, axis=-1, keepdims=True)
    xn = (xf - mean) / jnp.sqrt(var + _LN_EPS) * ln_w.astype(jnp.float32) \
        + ln_b.astype(jnp.float32)
    h = jnp.maximum(xn @ w1.astype(jnp.float32) + b1.astype(jnp.float32), 0.0)
    y = h @ w2.astype(jnp.float32) + b2.astype(jnp.float32)
    return (xf + y).astype(x.dtype)


# --------------------------------------------------------------------------
# Self-test
# --------------------------------------------------------------------------
if __name__ == "__main__":
    key = jax.random.PRNGKey(0)
    kx1, kx2, kx3, kp1, kp2, kp3 = jax.random.split(key, 6)

    # Case 1: toy shape from the module (B, N, D) = (2, 8, 32), mlp_ratio=1,
    # f32 weights, weight-resident path.
    B, N, D = 2, 8, 32
    x = jax.random.normal(kx1, (B, N, D), jnp.float32)
    raw1 = init_params(kp1, D, mlp_ratio=1)
    prep1 = prepare_params(*raw1)
    out1 = jax.block_until_ready(feature_mixer_layer(x, prep1))
    ref1 = _reference(x, *raw1)
    assert out1.shape == x.shape and out1.dtype == x.dtype
    assert jnp.allclose(out1, ref1, atol=1e-4, rtol=1e-4), "mismatch (case 1)"

    # Case 2: non-aligned rows and lanes (row + lane padding paths), mlp_ratio=2.
    B2, N2, D2 = 3, 5, 48
    x2 = jax.random.normal(kx2, (B2, N2, D2), jnp.float32)
    raw2 = init_params(kp2, D2, mlp_ratio=2)
    prep2 = prepare_params(*raw2)
    out2 = jax.block_until_ready(feature_mixer_layer(x2, prep2))
    ref2 = _reference(x2, *raw2)
    assert out2.shape == x2.shape and out2.dtype == x2.dtype
    assert jnp.allclose(out2, ref2, atol=1e-4, rtol=1e-4), "mismatch (case 2)"

    # Case 3: bf16 MXU compute + forced H-tiled (accumulator) path.
    D3 = 32
    x3 = jax.random.normal(kx3, (2, 8, D3), jnp.float32)
    raw3 = init_params(kp3, D3, mlp_ratio=8)
    prep3 = prepare_params(*raw3, compute_dtype=jnp.bfloat16)
    out3 = jax.block_until_ready(
        feature_mixer_layer(x3, prep3, force_h_tiling=True))
    ref3 = _reference(x3, *raw3)
    assert out3.shape == x3.shape and out3.dtype == x3.dtype
    assert jnp.allclose(out3, ref3, atol=2e-2, rtol=2e-2), "mismatch (case 3)"

    print("KERNEL_OK")
</pallas_src>

<mosaic_0001>
module attributes {stable_mosaic.version = 11 : i64} {
  func.func @kernel(%arg0: i32, %arg1: memref<8x128xf32, #tpu.memory_space<vmem>>, %arg2: memref<1x128xf32, #tpu.memory_space<vmem>>, %arg3: memref<1x128xf32, #tpu.memory_space<vmem>>, %arg4: memref<128x128xf32, #tpu.memory_space<vmem>>, %arg5: memref<1x128xf32, #tpu.memory_space<vmem>>, %arg6: memref<128x128xf32, #tpu.memory_space<vmem>>, %arg7: memref<1x128xf32, #tpu.memory_space<vmem>>, %arg8: memref<8x128xf32, #tpu.memory_space<vmem>>) attributes {dimension_semantics = [#tpu.dimension_semantics<parallel>], iteration_bounds = array<i64: 2>, scalar_prefetch = 0 : i64, scratch_operands = 0 : i64, tpu.core_type = #tpu.core_type<tc>, window_params = [{transform_indices = @transform_0, window_bounds = array<i64: 8, 128>}, {pipeline_mode = #tpu.pipeline_mode<synchronous>, transform_indices = @transform_1, window_bounds = array<i64: 1, 128>}, {pipeline_mode = #tpu.pipeline_mode<synchronous>, transform_indices = @transform_2, window_bounds = array<i64: 1, 128>}, {pipeline_mode = #tpu.pipeline_mode<synchronous>, transform_indices = @transform_3, window_bounds = array<i64: 128, 128>}, {pipeline_mode = #tpu.pipeline_mode<synchronous>, transform_indices = @transform_4, window_bounds = array<i64: 1, 128>}, {pipeline_mode = #tpu.pipeline_mode<synchronous>, transform_indices = @transform_5, window_bounds = array<i64: 128, 128>}, {pipeline_mode = #tpu.pipeline_mode<synchronous>, transform_indices = @transform_6, window_bounds = array<i64: 1, 128>}, {transform_indices = @transform_7, window_bounds = array<i64: 8, 128>}]} {
    %c0 = arith.constant 0 : index
    %c0_0 = arith.constant 0 : index
    %0 = vector.load %arg1[%c0, %c0_0] : memref<8x128xf32, #tpu.memory_space<vmem>>, vector<8x128xf32>
    %cst = arith.constant dense<0.000000e+00> : vector<8xf32>
    %1 = vector.multi_reduction <add>, %0, %cst [1] : vector<8x128xf32> to vector<8xf32>
    %2 = vector.shape_cast %1 : vector<8xf32> to vector<8x1xf32>
    %3 = arith.mulf %0, %0 : vector<8x128xf32>
    %cst_1 = arith.constant dense<0.000000e+00> : vector<8xf32>
    %4 = vector.multi_reduction <add>, %3, %cst_1 [1] : vector<8x128xf32> to vector<8xf32>
    %5 = vector.shape_cast %4 : vector<8xf32> to vector<8x1xf32>
    %cst_2 = arith.constant 3.125000e-02 : f32
    %6 = vector.broadcast %cst_2 : f32 to vector<8x1xf32>
    %7 = arith.mulf %2, %6 : vector<8x1xf32>
    %cst_3 = arith.constant 3.125000e-02 : f32
    %8 = vector.broadcast %cst_3 : f32 to vector<8x1xf32>
    %9 = arith.mulf %5, %8 : vector<8x1xf32>
    %10 = arith.mulf %7, %7 : vector<8x1xf32>
    %11 = arith.subf %9, %10 : vector<8x1xf32>
    %cst_4 = arith.constant 0.000000e+00 : f32
    %12 = vector.broadcast %cst_4 : f32 to vector<8x1xf32>
    %13 = arith.maximumf %11, %12 : vector<8x1xf32>
    %14 = vector.broadcast %7 : vector<8x1xf32> to vector<8x128xf32>
    %15 = arith.subf %0, %14 : vector<8x128xf32>
    %cst_5 = arith.constant 9.99999974E-6 : f32
    %16 = vector.broadcast %cst_5 : f32 to vector<8x1xf32>
    %17 = arith.addf %13, %16 : vector<8x1xf32>
    %18 = math.rsqrt %17 : vector<8x1xf32>
    %19 = vector.broadcast %18 : vector<8x1xf32> to vector<8x128xf32>
    %20 = arith.mulf %15, %19 : vector<8x128xf32>
    %c0_6 = arith.constant 0 : index
    %c0_7 = arith.constant 0 : index
    %21 = vector.load %arg2[%c0_6, %c0_7] : memref<1x128xf32, #tpu.memory_space<vmem>>, vector<1x128xf32>
    %22 = vector.broadcast %21 : vector<1x128xf32> to vector<8x128xf32>
    %23 = arith.mulf %20, %22 : vector<8x128xf32>
    %c0_8 = arith.constant 0 : index
    %c0_9 = arith.constant 0 : index
    %24 = vector.load %arg3[%c0_8, %c0_9] : memref<1x128xf32, #tpu.memory_space<vmem>>, vector<1x128xf32>
    %25 = vector.broadcast %24 : vector<1x128xf32> to vector<8x128xf32>
    %26 = arith.addf %23, %25 : vector<8x128xf32>
    %c0_10 = arith.constant 0 : index
    %c0_11 = arith.constant 0 : index
    %27 = vector.load %arg4[%c0_10, %c0_11] : memref<128x128xf32, #tpu.memory_space<vmem>>, vector<128x128xf32>
    %cst_12 = arith.constant dense<0.000000e+00> : vector<8x128xf32>
    %28 = tpu.matmul %26, %27, %cst_12 {dimension_numbers = #tpu.dot_dimension_numbers<[1], [0], [0], [1], [0, 0, 1, 1], [], []>} : vector<8x128xf32>, vector<128x128xf32>, vector<8x128xf32> -> vector<8x128xf32>
    %c0_13 = arith.constant 0 : index
    %c0_14 = arith.constant 0 : index
    %29 = vector.load %arg5[%c0_13, %c0_14] : memref<1x128xf32, #tpu.memory_space<vmem>>, vector<1x128xf32>
    %30 = vector.broadcast %29 : vector<1x128xf32> to vector<8x128xf32>
    %31 = arith.addf %28, %30 : vector<8x128xf32>
    %cst_15 = arith.constant 0.000000e+00 : f32
    %32 = vector.broadcast %cst_15 : f32 to vector<8x128xf32>
    %33 = arith.maximumf %31, %32 : vector<8x128xf32>
    %c0_16 = arith.constant 0 : index
    %c0_17 = arith.constant 0 : index
    %34 = vector.load %arg6[%c0_16, %c0_17] : memref<128x128xf32, #tpu.memory_space<vmem>>, vector<128x128xf32>
    %cst_18 = arith.constant dense<0.000000e+00> : vector<8x128xf32>
    %35 = tpu.matmul %33, %34, %cst_18 {dimension_numbers = #tpu.dot_dimension_numbers<[1], [0], [0], [1], [0, 0, 1, 1], [], []>} : vector<8x128xf32>, vector<128x128xf32>, vector<8x128xf32> -> vector<8x128xf32>
    %c0_19 = arith.constant 0 : index
    %c0_20 = arith.constant 0 : index
    %36 = vector.load %arg7[%c0_19, %c0_20] : memref<1x128xf32, #tpu.memory_space<vmem>>, vector<1x128xf32>
    %37 = vector.broadcast %36 : vector<1x128xf32> to vector<8x128xf32>
    %38 = arith.addf %35, %37 : vector<8x128xf32>
    %c0_21 = arith.constant 0 : index
    %c0_22 = arith.constant 0 : index
    %39 = vector.load %arg1[%c0_21, %c0_22] : memref<8x128xf32, #tpu.memory_space<vmem>>, vector<8x128xf32>
    %40 = arith.addf %39, %38 : vector<8x128xf32>
    %c0_23 = arith.constant 0 : index
    %c0_24 = arith.constant 0 : index
    %41 = vector.load %arg8[%c0_23, %c0_24] : memref<8x128xf32, #tpu.memory_space<vmem>>, vector<8x128xf32>
    tpu.vector_store %arg8[%c0_23, %c0_24], %40 {strides = array<i32>} : memref<8x128xf32, #tpu.memory_space<vmem>>, vector<8x128xf32>,
    return
  }
  func.func @transform_0(%arg0: i32) -> (i32, i32) {
    %c0_i32 = arith.constant 0 : i32
    %c0_i32_0 = arith.constant 0 : i32
    return %arg0, %c0_i32 : i32, i32
  }
  func.func @transform_1(%arg0: i32) -> (i32, i32) {
    %c0_i32 = arith.constant 0 : i32
    %c0_i32_0 = arith.constant 0 : i32
    %c0_i32_1 = arith.constant 0 : i32
    return %c0_i32, %c0_i32_0 : i32, i32
  }
  func.func @transform_2(%arg0: i32) -> (i32, i32) {
    %c0_i32 = arith.constant 0 : i32
    %c0_i32_0 = arith.constant 0 : i32
    %c0_i32_1 = arith.constant 0 : i32
    return %c0_i32, %c0_i32_0 : i32, i32
  }
  func.func @transform_3(%arg0: i32) -> (i32, i32) {
    %c0_i32 = arith.constant 0 : i32
    %c0_i32_0 = arith.constant 0 : i32
    %c0_i32_1 = arith.constant 0 : i32
    return %c0_i32, %c0_i32_0 : i32, i32
  }
  func.func @transform_4(%arg0: i32) -> (i32, i32) {
    %c0_i32 = arith.constant 0 : i32
    %c0_i32_0 = arith.constant 0 : i32
    %c0_i32_1 = arith.constant 0 : i32
    return %c0_i32, %c0_i32_0 : i32, i32
  }
  func.func @transform_5(%arg0: i32) -> (i32, i32) {
    %c0_i32 = arith.constant 0 : i32
    %c0_i32_0 = arith.constant 0 : i32
    %c0_i32_1 = arith.constant 0 : i32
    return %c0_i32, %c0_i32_0 : i32, i32
  }
  func.func @transform_6(%arg0: i32) -> (i32, i32) {
    %c0_i32 = arith.constant 0 : i32
    %c0_i32_0 = arith.constant 0 : i32
    %c0_i32_1 = arith.constant 0 : i32
    return %c0_i32, %c0_i32_0 : i32, i32
  }
  func.func @transform_7(%arg0: i32) -> (i32, i32) {
    %c0_i32 = arith.constant 0 : i32
    %c0_i32_0 = arith.constant 0 : i32
    return %arg0, %c0_i32 : i32, i32
  }
}

</mosaic_0001>

<llo_original>
// kernel: tpu_custom_call.1
$region0: #{tpu_custom_call.1}
  #allocation0 [shape = 'u32[]', space=smem, size = 0x4, offset = 0x4, fixed_abs, tag = 'smem constant byte address 0x4 - core index']
  #allocation1 [shape = 'u32[144,128]{1,0:T(1,128)}', space=vmem, size = 0x12000, scoped, tag = 'internal scratch']
  %s0 = inlined_call_operand.hbm [shape: f32[16,128], index: 0, kind: input, shape index: {}]
  %s1 = inlined_call_operand.vmem [shape: f32[1,128], index: 1, kind: input, shape index: {}]
  %s2 = inlined_call_operand.vmem [shape: f32[1,128], index: 2, kind: input, shape index: {}]
  %s3 = inlined_call_operand.hbm [shape: f32[128,128], index: 3, kind: input, shape index: {}]
  %s4 = inlined_call_operand.vmem [shape: f32[1,128], index: 4, kind: input, shape index: {}]
  %s5 = inlined_call_operand.hbm [shape: f32[128,128], index: 5, kind: input, shape index: {}]
  %s6 = inlined_call_operand.vmem [shape: f32[1,128], index: 6, kind: input, shape index: {}]
  %s7 = inlined_call_operand.hbm [shape: f32[16,128], index: 7, kind: output, shape index: {}]
  %s8 = sld [smem:[#allocation0]]
  $region73: #{tpu_custom_call.1} parent=0
    _
  %s10 = ssub.s32 1, %s8
  %s11 = scalar_select 0, %s10, %s8
  $region1: #{tpu_custom_call.1} parent=0
    #allocation2 [shape = 'u8[8192]{0}', space=vmem, size = 0x2000, scoped, tag = 'input window, operand 0']
    #allocation3 [shape = 's32[2]{0}', space=sflag, size = 0x8, scoped, tag = 'scoped memory for tpu_custom_call.1']
    #allocation4 [shape = 's32[2]{0}', space=sflag, size = 0x8, scoped, tag = 'scoped memory for tpu_custom_call.1']
    #allocation5 [shape = 'u8[65536]{0}', space=vmem, size = 0x10000, scoped, tag = 'input window, operand 3, single buffered']
    #allocation6 [shape = 's32[1]{0}', space=sflag, size = 0x4, scoped, tag = 'scoped memory for tpu_custom_call.1']
    #allocation7 [shape = 'u8[65536]{0}', space=vmem, size = 0x10000, scoped, tag = 'input window, operand 5, single buffered']
    #allocation8 [shape = 'u8[8192]{0}', space=vmem, size = 0x2000, scoped, tag = 'output window, operand 0']
    %12 = vsyncpa [#allocation3], 0
    %s13 = scalar_lea.sflag [#allocation3], 1
    %14 = vsyncpa %s13, 0
    %15 = vsyncpa [#allocation6], 0
    %16 = vsyncpa [#allocation4], 0
    %s17 = scalar_lea.sflag [#allocation4], 1
    %18 = vsyncpa %s17, 0
    loop: start=0, step=1, limit=4
    $region2: #{tpu_custom_call.1} parent=1 // loop_pre_header
      _
    $region3: #{tpu_custom_call.1} parent=1 // loop_header
      %s20 = sphi 0, %s24
      %p21 = scmp.ge.s32.totalorder %s20, 4
      %s30 = sphi 0, %s32
      %s33 = sphi 0, %s30
      %s34 = sphi 0, %s33
      %s50 = sphi 0, %s34
      %s54 = sphi 0, %s54
      %s56 = sphi 0, %s54
      %s57 = sphi 0, %s56
      %s71 = sphi 0, %s57
      %s75 = sphi 0, %s75
      %s77 = sphi 0, %s75
      %s78 = sphi 0, %s77
      %s92 = sphi 0, %s78
      %s96 = sphi 0, %s96
      %s98 = sphi 0, %s96
      %s99 = sphi 0, %s98
      %s113 = sphi 0, %s99
      %s117 = sphi 0, %s117
      %s119 = sphi 0, %s117
      %s120 = sphi 0, %s119
      %s134 = sphi 0, %s120
      %s138 = sphi 0, %s138
      %s140 = sphi 0, %s138
      %s141 = sphi 0, %s140
      %s155 = sphi 0, %s141
      %s159 = sphi 0, %s159
      %s161 = sphi 0, %s159
      %s162 = sphi 0, %s161
      %s176 = sphi 0, %s162
      %s182 = sphi 0, %s184
      %s185 = sphi 0, %s182
      %s186 = sphi 0, %s185
      %s202 = sphi 0, %s186
    $region4: #{tpu_custom_call.1} parent=1 // loop_header_branch
      %23 = sbr.rel (%p21) target = $region8
    $region5: #{tpu_custom_call.1} parent=1 // loop_body
      %s25 = ssub.s32 %s20, 1
      %s26 = ssub.s32 %s20, 2
      %s27 = sadd.s32 %s20, 1
      %s28 = ssub.s32 %s20, %s27
      %p29 = scmp.eq.s32.totalorder %s28, 0
      %s31 = sadd.s32 %s30, 1
      %s32 = scalar_select %p29, %s30, %s31
      %p35 = pneg %p29
      %p36 = scmp.eq.s32.totalorder %s20, 1
      %p37 = por %p35, %p36
      %p38 = scmp.ne.s32.totalorder %s30, %s33
      %p39 = scmp.eq.s32.totalorder %s20, 0
      %p40 = por %p38, %p39
      %p41 = scmp.ne.s32.totalorder %s30, %s33
      %p42 = scmp.eq.s32.totalorder %s25, 1
      %p43 = por %p41, %p42
      %p44 = scmp.ne.s32.totalorder %s33, %s34
      %p45 = scmp.eq.s32.totalorder %s25, 0
      %p46 = por %p44, %p45
      %p47 = scmp.ne.s32.totalorder %s33, %s34
      %p48 = scmp.eq.s32.totalorder %s26, 1
      %p49 = por %p47, %p48
      %p51 = scmp.ne.s32.totalorder %s34, %s50
      %p52 = scmp.eq.s32.totalorder %s26, 0
      %p53 = por %p51, %p52
      %s55 = sadd.s32 %s54, 1
      %p58 = scmp.eq.s32.totalorder %s20, 1
      %p59 = scmp.ne.s32.totalorder %s54, %s56
      %p60 = scmp.eq.s32.totalorder %s20, 0
      %p61 = por %p59, %p60
      %p62 = scmp.ne.s32.totalorder %s54, %s56
      %p63 = scmp.eq.s32.totalorder %s25, 1
      %p64 = por %p62, %p63
      %p65 = scmp.ne.s32.totalorder %s56, %s57
      %p66 = scmp.eq.s32.totalorder %s25, 0
      %p67 = por %p65, %p66
      %p68 = scmp.ne.s32.totalorder %s56, %s57
      %p69 = scmp.eq.s32.totalorder %s26, 1
      %p70 = por %p68, %p69
      %p72 = scmp.ne.s32.totalorder %s57, %s71
      %p73 = scmp.eq.s32.totalorder %s26, 0
      %p74 = por %p72, %p73
      %s76 = sadd.s32 %s75, 1
      %p79 = scmp.eq.s32.totalorder %s20, 1
      %p80 = scmp.ne.s32.totalorder %s75, %s77
      %p81 = scmp.eq.s32.totalorder %s20, 0
      %p82 = por %p80, %p81
      %p83 = scmp.ne.s32.totalorder %s75, %s77
      %p84 = scmp.eq.s32.totalorder %s25, 1
      %p85 = por %p83, %p84
      %p86 = scmp.ne.s32.totalorder %s77, %s78
      %p87 = scmp.eq.s32.totalorder %s25, 0
      %p88 = por %p86, %p87
      %p89 = scmp.ne.s32.totalorder %s77, %s78
      %p90 = scmp.eq.s32.totalorder %s26, 1
      %p91 = por %p89, %p90
      %p93 = scmp.ne.s32.totalorder %s78, %s92
      %p94 = scmp.eq.s32.totalorder %s26, 0
      %p95 = por %p93, %p94
      %s97 = sadd.s32 %s96, 1
      %p100 = scmp.eq.s32.totalorder %s20, 1
      %p101 = scmp.ne.s32.totalorder %s96, %s98
      %p102 = scmp.eq.s32.totalorder %s20, 0
      %p103 = por %p101, %p102
      %p104 = scmp.ne.s32.totalorder %s96, %s98
      %p105 = scmp.eq.s32.totalorder %s25, 1
      %p106 = por %p104, %p105
      %p107 = scmp.ne.s32.totalorder %s98, %s99
      %p108 = scmp.eq.s32.totalorder %s25, 0
      %p109 = por %p107, %p108
      %p110 = scmp.ne.s32.totalorder %s98, %s99
      %p111 = scmp.eq.s32.totalorder %s26, 1
      %p112 = por %p110, %p111
      %p114 = scmp.ne.s32.totalorder %s99, %s113
      %p115 = scmp.eq.s32.totalorder %s26, 0
      %p116 = por %p114, %p115
      %s118 = sadd.s32 %s117, 1
      %p121 = scmp.eq.s32.totalorder %s20, 1
      %p122 = scmp.ne.s32.totalorder %s117, %s119
      %p123 = scmp.eq.s32.totalorder %s20, 0
      %p124 = por %p122, %p123
      %p125 = scmp.ne.s32.totalorder %s117, %s119
      %p126 = scmp.eq.s32.totalorder %s25, 1
      %p127 = por %p125, %p126
      %p128 = scmp.ne.s32.totalorder %s119, %s120
      %p129 = scmp.eq.s32.totalorder %s25, 0
      %p130 = por %p128, %p129
      %p131 = scmp.ne.s32.totalorder %s119, %s120
      %p132 = scmp.eq.s32.totalorder %s26, 1
      %p133 = por %p131, %p132
      %p135 = scmp.ne.s32.totalorder %s120, %s134
      %p136 = scmp.eq.s32.totalorder %s26, 0
      %p137 = por %p135, %p136
      %s139 = sadd.s32 %s138, 1
      %p142 = scmp.eq.s32.totalorder %s20, 1
      %p143 = scmp.ne.s32.totalorder %s138, %s140
      %p144 = scmp.eq.s32.totalorder %s20, 0
      %p145 = por %p143, %p144
      %p146 = scmp.ne.s32.totalorder %s138, %s140
      %p147 = scmp.eq.s32.totalorder %s25, 1
      %p148 = por %p146, %p147
      %p149 = scmp.ne.s32.totalorder %s140, %s141
      %p150 = scmp.eq.s32.totalorder %s25, 0
      %p151 = por %p149, %p150
      %p152 = scmp.ne.s32.totalorder %s140, %s141
      %p153 = scmp.eq.s32.totalorder %s26, 1
      %p154 = por %p152, %p153
      %p156 = scmp.ne.s32.totalorder %s141, %s155
      %p157 = scmp.eq.s32.totalorder %s26, 0
      %p158 = por %p156, %p157
      %s160 = sadd.s32 %s159, 1
      %p163 = scmp.eq.s32.totalorder %s20, 1
      %p164 = scmp.ne.s32.totalorder %s159, %s161
      %p165 = scmp.eq.s32.totalorder %s20, 0
      %p166 = por %p164, %p165
      %p167 = scmp.ne.s32.totalorder %s159, %s161
      %p168 = scmp.eq.s32.totalorder %s25, 1
      %p169 = por %p167, %p168
      %p170 = scmp.ne.s32.totalorder %s161, %s162
      %p171 = scmp.eq.s32.totalorder %s25, 0
      %p172 = por %p170, %p171
      %p173 = scmp.ne.s32.totalorder %s161, %s162
      %p174 = scmp.eq.s32.totalorder %s26, 1
      %p175 = por %p173, %p174
      %p177 = scmp.ne.s32.totalorder %s162, %s176
      %p178 = scmp.eq.s32.totalorder %s26, 0
      %p179 = por %p177, %p178
      %s180 = ssub.s32 %s20, %s27
      %p181 = scmp.eq.s32.totalorder %s180, 0
      %s183 = sadd.s32 %s182, 1
      %s184 = scalar_select %p181, %s182, %s183
      %p187 = pneg %p181
      %p188 = scmp.eq.s32.totalorder %s20, 1
      %p189 = por %p187, %p188
      %p190 = scmp.ne.s32.totalorder %s182, %s185
      %p191 = scmp.eq.s32.totalorder %s20, 0
      %p192 = por %p190, %p191
      %p193 = scmp.ne.s32.totalorder %s182, %s185
      %p194 = scmp.eq.s32.totalorder %s25, 1
      %p195 = por %p193, %p194
      %p196 = scmp.ne.s32.totalorder %s185, %s186
      %p197 = scmp.eq.s32.totalorder %s25, 0
      %p198 = por %p196, %p197
      %p199 = scmp.ne.s32.totalorder %s185, %s186
      %p200 = scmp.eq.s32.totalorder %s26, 1
      %p201 = por %p199, %p200
      %p203 = scmp.ne.s32.totalorder %s186, %s202
      %p204 = scmp.eq.s32.totalorder %s26, 0
      %p205 = por %p203, %p204
      %p206 = scmp.le.s32.totalorder 1, %s20
      %p207 = scmp.lt.s32.totalorder %s20, 3
      %p208 = pnand %p206, %p207
      %p209 = pneg %p208
      // Predicated region
      $region9: #{tpu_custom_call.1} parent=5 // pred_check
        _
      $region10: #{tpu_custom_call.1} parent=5 // pred_check_branch
        %211 = sbr.rel (%p208) target = $region12
      $region11: #{tpu_custom_call.1} parent=5 // pred_region
        %s212 = ssub.s32 %s20, 1
        // Predicated region
        $region13: #{tpu_custom_call.1} parent=11 // pred_check
          %p213 = pneg %p67
        $region14: #{tpu_custom_call.1} parent=11 // pred_check_branch
          %215 = sbr.rel (%p213) target = $region16
        $region15: #{tpu_custom_call.1} parent=11 // pred_region
          _
        $region16: #{tpu_custom_call.1} parent=11 // pred_fallthru
          _
        // Predicated region
        $region17: #{tpu_custom_call.1} parent=11 // pred_check
          %p216 = pneg %p88
        $region18: #{tpu_custom_call.1} parent=11 // pred_check_branch
          %218 = sbr.rel (%p216) target = $region20
        $region19: #{tpu_custom_call.1} parent=11 // pred_region
          _
        $region20: #{tpu_custom_call.1} parent=11 // pred_fallthru
          _
        // Predicated region
        $region21: #{tpu_custom_call.1} parent=11 // pred_check
          %p219 = pneg %p109
        $region22: #{tpu_custom_call.1} parent=11 // pred_check_branch
          %221 = sbr.rel (%p219) target = $region24
        $region23: #{tpu_custom_call.1} parent=11 // pred_region
          %s223 = ssub.s32 2048, 2048
          %224 = vsyncadd [#allocation6], %s223
          %s225 = sshll.u32 [#allocation5], 4
          %s226 = int_to_ptr.vmem [resolvable:$true] %s225
          %231 = dma.hbm_to_vmem [thread:$0]  %s3, 2048, %s226, [#allocation6], 128, 128, 8
        $region24: #{tpu_custom_call.1} parent=11 // pred_fallthru
          _
        // Predicated region
        $region25: #{tpu_custom_call.1} parent=11 // pred_check
          %p232 = pneg %p130
        $region26: #{tpu_custom_call.1} parent=11 // pred_check_branch
          %234 = sbr.rel (%p232) target = $region28
        $region27: #{tpu_custom_call.1} parent=11 // pred_region
          _
        $region28: #{tpu_custom_call.1} parent=11 // pred_fallthru
          _
        // Predicated region
        $region29: #{tpu_custom_call.1} parent=11 // pred_check
          %p235 = pneg %p151
        $region30: #{tpu_custom_call.1} parent=11 // pred_check_branch
          %237 = sbr.rel (%p235) target = $region32
        $region31: #{tpu_custom_call.1} parent=11 // pred_region
          %s239 = ssub.s32 2048, 2048
          %240 = vsyncadd [#allocation6], %s239
          %s241 = sshll.u32 [#allocation7], 4
          %s242 = int_to_ptr.vmem [resolvable:$true] %s241
          %247 = dma.hbm_to_vmem [thread:$0]  %s5, 2048, %s242, [#allocation6], 128, 128, 8
        $region32: #{tpu_custom_call.1} parent=11 // pred_fallthru
          _
        // Predicated region
        $region33: #{tpu_custom_call.1} parent=11 // pred_check
          %p248 = pneg %p172
        $region34: #{tpu_custom_call.1} parent=11 // pred_check_branch
          %250 = sbr.rel (%p248) target = $region36
        $region35: #{tpu_custom_call.1} parent=11 // pred_region
          _
        $region36: #{tpu_custom_call.1} parent=11 // pred_fallthru
          _
      $region12: #{tpu_custom_call.1} parent=5 // pred_fallthru
        _
      %p251 = scmp.lt.s32.totalorder %s20, 2
      // Predicated region
      $region37: #{tpu_custom_call.1} parent=5 // pred_check
        %p252 = pneg %p251
      $region38: #{tpu_custom_call.1} parent=5 // pred_check_branch
        %254 = sbr.rel (%p252) target = $region40
      $region39: #{tpu_custom_call.1} parent=5 // pred_region
        // Predicated region
        $region41: #{tpu_custom_call.1} parent=39 // pred_check
          %p255 = pneg %p40
        $region42: #{tpu_custom_call.1} parent=39 // pred_check_branch
          %257 = sbr.rel (%p255) target = $region44
        $region43: #{tpu_custom_call.1} parent=39 // pred_region
          %s258 = sand.u32 %s30, 1
          %s259 = scalar_lea.sflag [#allocation3], %s258
          %s260 = sand.u32 %s30, 1
          %s261 = smul.addr %s260, 8
          %s262 = scalar_lea.vmem [#allocation2], %s261
          %s264 = ssub.s32 128, 128
          %265 = vsyncadd %s259, %s264
          %s266 = smul.addr %s20, 128
          %s267 = scalar_lea.hbm %s0, %s266
          %s269 = sshll.u32 %s262, 4
          %s270 = int_to_ptr.vmem [resolvable:$true] %s269
          %272 = dma.hbm_to_vmem [thread:$0]  %s267, 128, %s270, %s259
        $region44: #{tpu_custom_call.1} parent=39 // pred_fallthru
          _
      $region40: #{tpu_custom_call.1} parent=5 // pred_fallthru
        _
      %p273 = scmp.le.s32.totalorder 1, %s20
      %p274 = scmp.lt.s32.totalorder %s20, 3
      %p275 = pnand %p273, %p274
      %p276 = pneg %p275
      // Predicated region
      $region45: #{tpu_custom_call.1} parent=5 // pred_check
        _
      $region46: #{tpu_custom_call.1} parent=5 // pred_check_branch
        %278 = sbr.rel (%p275) target = $region48
      $region47: #{tpu_custom_call.1} parent=5 // pred_region
        %s279 = ssub.s32 %s20, 1
        %s280 = sand.u32 %s33, 1
        %s281 = scalar_lea.sflag [#allocation3], %s280
        %s282 = sand.u32 %s33, 1
        %s283 = smul.addr %s282, 8
        %s284 = scalar_lea.vmem [#allocation2], %s283
        // Predicated region
        $region49: #{tpu_custom_call.1} parent=47 // pred_check
          %p285 = pneg %p46
        $region50: #{tpu_custom_call.1} parent=47 // pred_check_branch
          %287 = sbr.rel (%p285) target = $region52
        $region51: #{tpu_custom_call.1} parent=47 // pred_region
          %288 = dma.done %s281, 128
        $region52: #{tpu_custom_call.1} parent=47 // pred_fallthru
          _
        // Predicated region
        $region53: #{tpu_custom_call.1} parent=47 // pred_check
          %p289 = pneg %p109
        $region54: #{tpu_custom_call.1} parent=47 // pred_check_branch
          %291 = sbr.rel (%p289) target = $region56
        $region55: #{tpu_custom_call.1} parent=47 // pred_region
          %292 = dma.done [#allocation6], 2048
        $region56: #{tpu_custom_call.1} parent=47 // pred_fallthru
          _
        // Predicated region
        $region57: #{tpu_custom_call.1} parent=47 // pred_check
          %p293 = pneg %p151
        $region58: #{tpu_custom_call.1} parent=47 // pred_check_branch
          %295 = sbr.rel (%p293) target = $region60
        $region59: #{tpu_custom_call.1} parent=47 // pred_region
          %296 = dma.done [#allocation6], 2048
        $region60: #{tpu_custom_call.1} parent=47 // pred_fallthru
          _
        %s297 = sand.u32 %s33, 1
        %s298 = scalar_lea.sflag [#allocation3], %s297
        %s299 = sand.u32 %s33, 1
        %s300 = smul.addr %s299, 8
        %s301 = scalar_lea.vmem [#allocation2], %s300
        %p302 = pneg %p46
        %p303 = pneg %p43
        %p304 = pneg %p67
        %p305 = pneg %p64
        %p306 = pneg %p88
        %p307 = pneg %p85
        %p308 = pneg %p109
        %p309 = pneg %p106
        %p310 = pneg %p130
        %p311 = pneg %p127
        %p312 = pneg %p151
        %p313 = pneg %p148
        %p314 = pneg %p172
        %p315 = pneg %p169
        %p316 = pneg %p198
        %p317 = pneg %p195
        %s318 = sand.u32 %s185, 1
        %s319 = scalar_lea.sflag [#allocation4], %s318
        %s320 = sand.u32 %s185, 1
        %s321 = smul.addr %s320, 8
        %s322 = scalar_lea.vmem [#allocation8], %s321
        %v323 = vld [vmem:[%s284] sm:$0xff]
        %324 = vadd.xlane.f32.xlu0 %v323
        %v325 = vpop.xlane.xlu0 %324
        %v326 = vmul.f32 %v323, %v323
        %327 = vadd.xlane.f32.xlu0 %v326
        %v328 = vpop.xlane.xlu0 %327
        %v329 = vmul.f32 %v325, 0.03125
        %v330 = vmul.f32 %v328, 0.03125
        %v331 = vmul.f32 %v329, %v329
        %v332 = vsub.f32 %v330, %v331
        %v333 = vmax.f32 %v332, 0.0
        %v334 = vsub.f32 %v323, %v329
        %v335 = vadd.f32 %v333, 1e-05
        %v336 = vrsqrt.pop %v335
        %v337 = vmul.f32 %v334, %v336
        %v338 = vld [vmem:[%s1] sm:$0x1]
        %v340 = vlaneseq
        %v341 = vshrl.u32 %v340, 7
        %v342 = vsub.s32 0, %v341
        %v343 = vrot.slane %v338, %v342
        %v345 = vmul.f32 %v337, %v343
        %v346 = vld [vmem:[%s2] sm:$0x1]
        %v348 = vlaneseq
        %v349 = vshrl.u32 %v348, 7
        %v350 = vsub.s32 0, %v349
        %v351 = vrot.slane %v346, %v350
        %v353 = vadd.f32 %v345, %v351
        %v354 = vld [vmem:[#allocation5] sm:$0xff]
        %v355 = vld [vmem:[#allocation5 + $0x8] sm:$0xff]
        %v356 = vld [vmem:[#allocation5 + $0x10] sm:$0xff]
        %v357 = vld [vmem:[#allocation5 + $0x18] sm:$0xff]
        %v358 = vld [vmem:[#allocation5 + $0x20] sm:$0xff]
        %v359 = vld [vmem:[#allocation5 + $0x28] sm:$0xff]
        %v360 = vld [vmem:[#allocation5 + $0x30] sm:$0xff]
        %v361 = vld [vmem:[#allocation5 + $0x38] sm:$0xff]
        %v362 = vld [vmem:[#allocation5 + $0x40] sm:$0xff]
        %v363 = vld [vmem:[#allocation5 + $0x48] sm:$0xff]
        %v364 = vld [vmem:[#allocation5 + $0x50] sm:$0xff]
        %v365 = vld [vmem:[#allocation5 + $0x58] sm:$0xff]
        %v366 = vld [vmem:[#allocation5 + $0x60] sm:$0xff]
        %v367 = vld [vmem:[#allocation5 + $0x68] sm:$0xff]
        %v368 = vld [vmem:[#allocation5 + $0x70] sm:$0xff]
        %v369 = vld [vmem:[#allocation5 + $0x78] sm:$0xff]
        %v370 = vld [vmem:[%s4] sm:$0x1]
        %v372 = vlaneseq
        %v373 = vshrl.u32 %v372, 7
        %v374 = vsub.s32 0, %v373
        %v375 = vrot.slane %v370, %v374
        %377 = vmatprep.subr.mxu0 0.0
        %378 = vmatpush1.msra.mxu0 %v354
        %379 = vmatprep.subr.mxu0 0.0
        %380 = vmatpush1.msra.mxu0 %v355
        %381 = vmatprep.subr.mxu0 0.0
        %382 = vmatpush1.msra.mxu0 %v356
        %383 = vmatprep.subr.mxu0 0.0
        %384 = vmatpush1.msra.mxu0 %v357
        %385 = vmatprep.subr.mxu0 0.0
        %386 = vmatpush1.msra.mxu0 %v358
        %387 = vmatprep.subr.mxu0 0.0
        %388 = vmatpush1.msra.mxu0 %v359
        %389 = vmatprep.subr.mxu0 0.0
        %390 = vmatpush1.msra.mxu0 %v360
        %391 = vmatprep.subr.mxu0 0.0
        %392 = vmatpush1.msra.mxu0 %v361
        %393 = vmatprep.subr.mxu0 0.0
        %394 = vmatpush1.msra.mxu0 %v362
        %395 = vmatprep.subr.mxu0 0.0
        %396 = vmatpush1.msra.mxu0 %v363
        %397 = vmatprep.subr.mxu0 0.0
        %398 = vmatpush1.msra.mxu0 %v364
        %399 = vmatprep.subr.mxu0 0.0
        %400 = vmatpush1.msra.mxu0 %v365
        %401 = vmatprep.subr.mxu0 0.0
        %402 = vmatpush1.msra.mxu0 %v366
        %403 = vmatprep.subr.mxu0 0.0
        %404 = vmatpush1.msra.mxu0 %v367
        %405 = vmatprep.subr.mxu0 0.0
        %406 = vmatpush1.msra.mxu0 %v368
        %407 = vmatprep.subr.mxu0 0.0
        %408 = vmatpush1.msra.mxu0 %v369
        %409 = vmatprep.subr.mxu0 0.0
        %410 = vmatpush1.msra.mxu0 0.0
        %411 = vmatprep.subr.mxu0 0.0
        %412 = vmatpush1.msra.mxu0 0.0
        %413 = vmatprep.subr.mxu0 0.0
        %414 = vmatpush1.msra.mxu0 0.0
        %415 = vmatprep.subr.mxu0 0.0
        %416 = vmatpush1.msra.mxu0 0.0
        %417 = vmatprep.subr.mxu0 0.0
        %418 = vmatpush1.msra.mxu0 0.0
        %419 = vmatprep.subr.mxu0 0.0
        %420 = vmatpush1.msra.mxu0 0.0
        %421 = vmatprep.subr.mxu0 0.0
        %422 = vmatpush1.msra.mxu0 0.0
        %423 = vmatprep.subr.mxu0 0.0
        %424 = vmatpush1.msra.mxu0 0.0
        %425 = vmatprep.subr.mxu0 0.0
        %426 = vmatpush1.msra.mxu0 0.0
        %427 = vmatprep.subr.mxu0 0.0
        %428 = vmatpush1.msra.mxu0 0.0
        %429 = vmatprep.subr.mxu0 0.0
        %430 = vmatpush1.msra.mxu0 0.0
        %431 = vmatprep.subr.mxu0 0.0
        %432 = vmatpush1.msra.mxu0 0.0
        %433 = vmatprep.subr.mxu0 0.0
        %434 = vmatpush1.msra.mxu0 0.0
        %435 = vmatprep.subr.mxu0 0.0
        %436 = vmatpush1.msra.mxu0 0.0
        %437 = vmatprep.subr.mxu0 0.0
        %438 = vmatpush1.msra.mxu0 0.0
        %439 = vmatprep.subr.mxu0 0.0
        %440 = vmatpush1.msra.mxu0 0.0
        %441 = vmatprep.mubr.f32.mxu0 0.0
        %442 = vmatmul.mubr.f32.gmra.mrb[0].mxu0 %v353
        %v443 = vpop.f32.mrb[0].mxu0
        %v444 = vadd.f32 %v375, %v443
        %v445 = vpop.f32.mrb[0].mxu0
        %446 = vdwg.mxu0
        %v447 = vmax.f32 %v444, 0.0
        %v448 = vld [vmem:[#allocation7] sm:$0xff]
        %v449 = vld [vmem:[#allocation7 + $0x8] sm:$0xff]
        %v450 = vld [vmem:[#allocation7 + $0x10] sm:$0xff]
        %v451 = vld [vmem:[#allocation7 + $0x18] sm:$0xff]
        %v452 = vld [vmem:[#allocation7 + $0x20] sm:$0xff]
        %v453 = vld [vmem:[#allocation7 + $0x28] sm:$0xff]
        %v454 = vld [vmem:[#allocation7 + $0x30] sm:$0xff]
        %v455 = vld [vmem:[#allocation7 + $0x38] sm:$0xff]
        %v456 = vld [vmem:[#allocation7 + $0x40] sm:$0xff]
        %v457 = vld [vmem:[#allocation7 + $0x48] sm:$0xff]
        %v458 = vld [vmem:[#allocation7 + $0x50] sm:$0xff]
        %v459 = vld [vmem:[#allocation7 + $0x58] sm:$0xff]
        %v460 = vld [vmem:[#allocation7 + $0x60] sm:$0xff]
        %v461 = vld [vmem:[#allocation7 + $0x68] sm:$0xff]
        %v462 = vld [vmem:[#allocation7 + $0x70] sm:$0xff]
        %v463 = vld [vmem:[#allocation7 + $0x78] sm:$0xff]
        %v464 = vld [vmem:[%s6] sm:$0x1]
        %v466 = vlaneseq
        %v467 = vshrl.u32 %v466, 7
        %v468 = vsub.s32 0, %v467
        %v469 = vrot.slane %v464, %v468
        %471 = vmatprep.subr.mxu0 0.0
        %472 = vmatpush1.msra.mxu0 %v448
        %473 = vmatprep.subr.mxu0 0.0
        %474 = vmatpush1.msra.mxu0 %v449
        %475 = vmatprep.subr.mxu0 0.0
        %476 = vmatpush1.msra.mxu0 %v450
        %477 = vmatprep.subr.mxu0 0.0
        %478 = vmatpush1.msra.mxu0 %v451
        %479 = vmatprep.subr.mxu0 0.0
        %480 = vmatpush1.msra.mxu0 %v452
        %481 = vmatprep.subr.mxu0 0.0
        %482 = vmatpush1.msra.mxu0 %v453
        %483 = vmatprep.subr.mxu0 0.0
        %484 = vmatpush1.msra.mxu0 %v454
        %485 = vmatprep.subr.mxu0 0.0
        %486 = vmatpush1.msra.mxu0 %v455
        %487 = vmatprep.subr.mxu0 0.0
        %488 = vmatpush1.msra.mxu0 %v456
        %489 = vmatprep.subr.mxu0 0.0
        %490 = vmatpush1.msra.mxu0 %v457
        %491 = vmatprep.subr.mxu0 0.0
        %492 = vmatpush1.msra.mxu0 %v458
        %493 = vmatprep.subr.mxu0 0.0
        %494 = vmatpush1.msra.mxu0 %v459
        %495 = vmatprep.subr.mxu0 0.0
        %496 = vmatpush1.msra.mxu0 %v460
        %497 = vmatprep.subr.mxu0 0.0
        %498 = vmatpush1.msra.mxu0 %v461
        %499 = vmatprep.subr.mxu0 0.0
        %500 = vmatpush1.msra.mxu0 %v462
        %501 = vmatprep.subr.mxu0 0.0
        %502 = vmatpush1.msra.mxu0 %v463
        %503 = vmatprep.subr.mxu0 0.0
        %504 = vmatpush1.msra.mxu0 0.0
        %505 = vmatprep.subr.mxu0 0.0
        %506 = vmatpush1.msra.mxu0 0.0
        %507 = vmatprep.subr.mxu0 0.0
        %508 = vmatpush1.msra.mxu0 0.0
        %509 = vmatprep.subr.mxu0 0.0
        %510 = vmatpush1.msra.mxu0 0.0
        %511 = vmatprep.subr.mxu0 0.0
        %512 = vmatpush1.msra.mxu0 0.0
        %513 = vmatprep.subr.mxu0 0.0
        %514 = vmatpush1.msra.mxu0 0.0
        %515 = vmatprep.subr.mxu0 0.0
        %516 = vmatpush1.msra.mxu0 0.0
        %517 = vmatprep.subr.mxu0 0.0
        %518 = vmatpush1.msra.mxu0 0.0
        %519 = vmatprep.subr.mxu0 0.0
        %520 = vmatpush1.msra.mxu0 0.0
        %521 = vmatprep.subr.mxu0 0.0
        %522 = vmatpush1.msra.mxu0 0.0
        %523 = vmatprep.subr.mxu0 0.0
        %524 = vmatpush1.msra.mxu0 0.0
        %525 = vmatprep.subr.mxu0 0.0
        %526 = vmatpush1.msra.mxu0 0.0
        %527 = vmatprep.subr.mxu0 0.0
        %528 = vmatpush1.msra.mxu0 0.0
        %529 = vmatprep.subr.mxu0 0.0
        %530 = vmatpush1.msra.mxu0 0.0
        %531 = vmatprep.subr.mxu0 0.0
        %532 = vmatpush1.msra.mxu0 0.0
        %533 = vmatprep.subr.mxu0 0.0
        %534 = vmatpush1.msra.mxu0 0.0
        %535 = vmatprep.mubr.f32.mxu0 0.0
        %536 = vmatmul.mubr.f32.gmra.mrb[0].mxu0 %v447
        %v537 = vpop.f32.mrb[0].mxu0
        %v538 = vadd.f32 %v469, %v537
        %v539 = vpop.f32.mrb[0].mxu0
        %540 = vdwg.mxu0
        %v541 = vadd.f32 %v323, %v538
        %542 = vst [vmem:[%s322] sm:$0xff] %v541
        %s543 = sand.u32 %s185, 1
        %s544 = scalar_lea.sflag [#allocation4], %s543
        %s545 = sand.u32 %s185, 1
        %s546 = smul.addr %s545, 8
        %s547 = scalar_lea.vmem [#allocation8], %s546
        // Predicated region
        $region61: #{tpu_custom_call.1} parent=47 // pred_check
          %p548 = pneg %p195
        $region62: #{tpu_custom_call.1} parent=47 // pred_check_branch
          %550 = sbr.rel (%p548) target = $region64
        $region63: #{tpu_custom_call.1} parent=47 // pred_region
          %s552 = ssub.s32 128, 128
          %553 = vsyncadd %s544, %s552
          %s554 = smul.addr %s25, 128
          %s555 = scalar_lea.hbm %s7, %s554
          %s557 = sshll.u32 %s547, 4
          %s558 = int_to_ptr.vmem [resolvable:$true] %s557
          %560 = dma.vmem_to_hbm [thread:$0]  %s558, 128, %s555, %s544
        $region64: #{tpu_custom_call.1} parent=47 // pred_fallthru
          _
      $region48: #{tpu_custom_call.1} parent=5 // pred_fallthru
        _
      %p561 = scmp.le.s32.totalorder 2, %s20
      // Predicated region
      $region65: #{tpu_custom_call.1} parent=5 // pred_check
        %p562 = pneg %p561
      $region66: #{tpu_custom_call.1} parent=5 // pred_check_branch
        %564 = sbr.rel (%p562) target = $region68
      $region67: #{tpu_custom_call.1} parent=5 // pred_region
        %s565 = ssub.s32 %s20, 2
        // Predicated region
        $region69: #{tpu_custom_call.1} parent=67 // pred_check
          %p566 = pneg %p201
        $region70: #{tpu_custom_call.1} parent=67 // pred_check_branch
          %568 = sbr.rel (%p566) target = $region72
        $region71: #{tpu_custom_call.1} parent=67 // pred_region
          %s569 = sand.u32 %s186, 1
          %s570 = scalar_lea.sflag [#allocation4], %s569
          %s571 = sand.u32 %s186, 1
          %s572 = smul.addr %s571, 8
          %s573 = scalar_lea.vmem [#allocation8], %s572
          %574 = dma.done %s570, 128
        $region72: #{tpu_custom_call.1} parent=67 // pred_fallthru
          _
      $region68: #{tpu_custom_call.1} parent=5 // pred_fallthru
        _
    $region6: #{tpu_custom_call.1} parent=1 // loop_footer
      %s24 = sadd.s32 1, %s20
    $region7: #{tpu_custom_call.1} parent=1 // loop_footer_branch
      %19 = sbr.rel target = $region3
    $region8: #{tpu_custom_call.1} parent=1 // loop_exit
      _
    %575 = vsyncpa [#allocation3], 1
    %s576 = scalar_lea.sflag [#allocation3], 1
    %577 = vsyncpa %s576, 1
    %578 = vsyncpa [#allocation6], 1
    %579 = vsyncpa [#allocation4], 1
    %s580 = scalar_lea.sflag [#allocation4], 1
    %581 = vsyncpa %s580, 1

</llo_original>
